<compile_context>
chip_gen: v7x
topology: tpu7x:2x2x1
jax: 0.10.0
libtpu: 0.0.40
codegen_flags: <defaults>
</compile_context>

<pallas_src>
import functools

import jax
import jax.numpy as jnp
from jax.experimental import pallas as pl
from jax.experimental.pallas import tpu as pltpu

EPS = 1e-5  # torch.nn.functional.layer_norm default


def finetune_kernel(p_ref, w_ref, b_ref, o_ref, *, d_valid):
    """One batch tile.

    p_ref: (bt, F)  token-mean of the patches (pooled before the matmul)
    w_ref: (F, Dp)  patch-embedding weight, zero-padded to Dp lanes
    b_ref: (1, Dp)  patch-embedding bias,  zero-padded to Dp lanes
    o_ref: (bt, Dp) layer-normalised pooled features (lanes >= d_valid are 0)
    """
    pooled = p_ref[...]
    # mean_N(patches @ W + b) == mean_N(patches) @ W + b  (linearity), so this
    # single matmul is exactly the module's torch.mean(backbone(x), dim=1).
    y = jnp.dot(pooled, w_ref[...], preferred_element_type=jnp.float32)
    y = y + b_ref[...].astype(jnp.float32)

    # F.layer_norm(y, (D,)) with no affine params.  Statistics are taken over
    # the D valid lanes only; lanes >= d_valid are zero padding that exists
    # purely to make the output store lane-dense.
    col = jax.lax.broadcasted_iota(jnp.int32, y.shape, 1)
    valid = col < d_valid
    inv_d = 1.0 / d_valid
    mu = jnp.sum(jnp.where(valid, y, 0.0), axis=-1, keepdims=True) * inv_d
    centered = jnp.where(valid, y - mu, 0.0)
    var = jnp.sum(centered * centered, axis=-1, keepdims=True) * inv_d
    o_ref[...] = (centered * jax.lax.rsqrt(var + EPS)).astype(o_ref.dtype)


def finetuning_forward(x_nchw, w, b, patch=4, matmul_dtype=jnp.float32):
    """x_nchw: (B, C, H, W) float32.  Returns (B, D) normalised features."""
    B, C, H, Wim = x_nchw.shape
    P = patch
    F = C * P * P
    D = w.shape[-1]
    Dp = ((D + 127) // 128) * 128  # lane-dense output width

    # Pool tokens BEFORE the matmul.  XLA fuses patchify + mean into one pass
    # over the raw image; only the tiny (B, F) pooled tensor reaches HBM (the
    # previous version materialised a full (B, N, F) patch copy and re-read
    # it).  Patch feature order = (C, Ph, Pw), matching the reference backbone.
    pooled = (x_nchw.reshape(B, C, H // P, P, Wim // P, P)
              .mean(axis=(2, 4))
              .reshape(B, F))

    # Zero-pad D -> Dp so the kernel's output store is an unmasked vst.
    w_p = jnp.pad(w, ((0, 0), (0, Dp - D)))
    b_p = jnp.pad(b.reshape(1, D), ((0, 0), (0, Dp - D))).astype(jnp.float32)

    # Optional bf16 MXU path (v6e/v7x): cast the matmul operands only; the
    # accumulation and all layer-norm math stay f32.
    pooled = pooled.astype(matmul_dtype)
    w_p = w_p.astype(matmul_dtype)

    # Batch tiling: one grid step per tile of `bt` rows, marked "parallel" so
    # v7x's two TensorCores can split the batch.  The tiny demo batch is a
    # single tile; at real sizes pick the largest multiple-of-8 tile that fits
    # VMEM (and K-tile over F with an f32 VMEM accumulator + explicit
    # vmem_limit_bytes on v7x's 64 MiB VMEM if F/D grow to real ViT sizes).
    if B % 8 == 0:
        bt = min(B, 512)
        while B % bt:
            bt //= 2
    else:
        bt = B  # small batch: single full-array tile
    grid = (B // bt,)

    out = pl.pallas_call(
        functools.partial(finetune_kernel, d_valid=D),
        out_shape=jax.ShapeDtypeStruct((B, Dp), jnp.float32),
        grid=grid,
        in_specs=[
            pl.BlockSpec((bt, F), lambda i: (i, 0)),
            pl.BlockSpec((F, Dp), lambda i: (0, 0)),
            pl.BlockSpec((1, Dp), lambda i: (0, 0)),
        ],
        out_specs=pl.BlockSpec((bt, Dp), lambda i: (i, 0)),
        compiler_params=pltpu.CompilerParams(
            dimension_semantics=("parallel",)),
    )(pooled, w_p, b_p)

    return out[:, :D]


def reference_forward(x_nchw, w, b, patch=4):
    """Original (un-restructured) order: patchify -> matmul -> mean -> LN."""
    B, C, H, Wim = x_nchw.shape
    P = patch
    F = C * P * P
    patches = x_nchw.reshape(B, C, H // P, P, Wim // P, P)
    patches = patches.transpose(0, 2, 4, 1, 3, 5).reshape(B, -1, F)
    tokens = patches @ w + b[None, None, :]   # (B, N, D)
    pooled = tokens.mean(axis=1)              # (B, D)  == torch.mean(x, dim=1)
    mu = pooled.mean(axis=-1, keepdims=True)
    var = ((pooled - mu) ** 2).mean(axis=-1, keepdims=True)
    return (pooled - mu) / jnp.sqrt(var + EPS)


if __name__ == "__main__":
    B, C, H, W = 2, 4, 16, 16
    P = 4
    D = 32
    F = C * P * P

    key = jax.random.PRNGKey(0)
    kx, kw, kb = jax.random.split(key, 3)
    x = jax.random.normal(kx, (B, C, H, W), dtype=jnp.float32)
    w = jax.random.normal(kw, (F, D), dtype=jnp.float32) * 0.02
    bias = jax.random.normal(kb, (D,), dtype=jnp.float32) * 0.01

    ref = reference_forward(x, w, bias, patch=P)

    # f32 MXU path (default; v5e-friendly) — tight tolerance.
    out = jax.block_until_ready(finetuning_forward(x, w, bias, patch=P))
    assert out.shape == (B, D)
    assert jnp.allclose(out, ref, atol=1e-4, rtol=1e-4), "f32 mismatch vs. reference"

    # bf16 MXU path (v6e/v7x) — f32 accumulation, looser tolerance from the
    # bf16 rounding of the matmul operands.
    out_bf16 = jax.block_until_ready(
        finetuning_forward(x, w, bias, patch=P, matmul_dtype=jnp.bfloat16))
    assert out_bf16.shape == (B, D)
    assert jnp.allclose(out_bf16, ref, atol=5e-2, rtol=5e-2), "bf16 mismatch vs. reference"

    print("KERNEL_OK")
</pallas_src>

<mosaic_0001>
module attributes {stable_mosaic.version = 11 : i64} {
  func.func @finetune_kernel(%arg0: i32, %arg1: memref<2x64xf32, #tpu.memory_space<vmem>>, %arg2: memref<64x128xf32, #tpu.memory_space<vmem>>, %arg3: memref<1x128xf32, #tpu.memory_space<vmem>>, %arg4: memref<2x128xf32, #tpu.memory_space<vmem>>) attributes {dimension_semantics = [#tpu.dimension_semantics<parallel>], iteration_bounds = array<i64: 1>, scalar_prefetch = 0 : i64, scratch_operands = 0 : i64, tpu.core_type = #tpu.core_type<tc>, window_params = [{transform_indices = @transform_0, window_bounds = array<i64: 2, 64>}, {pipeline_mode = #tpu.pipeline_mode<synchronous>, transform_indices = @transform_1, window_bounds = array<i64: 64, 128>}, {pipeline_mode = #tpu.pipeline_mode<synchronous>, transform_indices = @transform_2, window_bounds = array<i64: 1, 128>}, {transform_indices = @transform_3, window_bounds = array<i64: 2, 128>}]} {
    %c0 = arith.constant 0 : index
    %c0_0 = arith.constant 0 : index
    %0 = vector.load %arg1[%c0, %c0_0] : memref<2x64xf32, #tpu.memory_space<vmem>>, vector<2x64xf32>
    %c0_1 = arith.constant 0 : index
    %c0_2 = arith.constant 0 : index
    %1 = vector.load %arg2[%c0_1, %c0_2] : memref<64x128xf32, #tpu.memory_space<vmem>>, vector<64x128xf32>
    %cst = arith.constant dense<0.000000e+00> : vector<2x128xf32>
    %2 = tpu.matmul %0, %1, %cst {dimension_numbers = #tpu.dot_dimension_numbers<[1], [0], [0], [1], [0, 0, 1, 1], [], []>} : vector<2x64xf32>, vector<64x128xf32>, vector<2x128xf32> -> vector<2x128xf32>
    %c0_3 = arith.constant 0 : index
    %c0_4 = arith.constant 0 : index
    %3 = vector.load %arg3[%c0_3, %c0_4] : memref<1x128xf32, #tpu.memory_space<vmem>>, vector<1x128xf32>
    %4 = vector.broadcast %3 : vector<1x128xf32> to vector<2x128xf32>
    %5 = arith.addf %2, %4 : vector<2x128xf32>
    %6 = tpu.iota {dimensions = array<i32: 1>} : vector<2x128xi32>
    %c32_i32 = arith.constant 32 : i32
    %7 = vector.broadcast %c32_i32 : i32 to vector<2x128xi32>
    %8 = arith.cmpi slt, %6, %7 : vector<2x128xi32>
    %cst_5 = arith.constant 0.000000e+00 : f32
    %9 = vector.broadcast %cst_5 : f32 to vector<2x128xf32>
    %10 = arith.select %8, %5, %9 : vector<2x128xi1>, vector<2x128xf32>
    %cst_6 = arith.constant dense<0.000000e+00> : vector<2xf32>
    %11 = vector.multi_reduction <add>, %10, %cst_6 [1] : vector<2x128xf32> to vector<2xf32>
    %12 = vector.shape_cast %11 : vector<2xf32> to vector<2x1xf32>
    %cst_7 = arith.constant 3.125000e-02 : f32
    %13 = vector.broadcast %cst_7 : f32 to vector<2x1xf32>
    %14 = arith.mulf %12, %13 : vector<2x1xf32>
    %15 = vector.broadcast %14 : vector<2x1xf32> to vector<2x128xf32>
    %16 = arith.subf %5, %15 : vector<2x128xf32>
    %cst_8 = arith.constant 0.000000e+00 : f32
    %17 = vector.broadcast %cst_8 : f32 to vector<2x128xf32>
    %18 = arith.select %8, %16, %17 : vector<2x128xi1>, vector<2x128xf32>
    %19 = arith.mulf %18, %18 : vector<2x128xf32>
    %cst_9 = arith.constant dense<0.000000e+00> : vector<2xf32>
    %20 = vector.multi_reduction <add>, %19, %cst_9 [1] : vector<2x128xf32> to vector<2xf32>
    %21 = vector.shape_cast %20 : vector<2xf32> to vector<2x1xf32>
    %cst_10 = arith.constant 3.125000e-02 : f32
    %22 = vector.broadcast %cst_10 : f32 to vector<2x1xf32>
    %23 = arith.mulf %21, %22 : vector<2x1xf32>
    %cst_11 = arith.constant 9.99999974E-6 : f32
    %24 = vector.broadcast %cst_11 : f32 to vector<2x1xf32>
    %25 = arith.addf %23, %24 : vector<2x1xf32>
    %26 = math.rsqrt %25 : vector<2x1xf32>
    %27 = vector.broadcast %26 : vector<2x1xf32> to vector<2x128xf32>
    %28 = arith.mulf %18, %27 : vector<2x128xf32>
    %c0_12 = arith.constant 0 : index
    %c0_13 = arith.constant 0 : index
    %29 = vector.load %arg4[%c0_12, %c0_13] : memref<2x128xf32, #tpu.memory_space<vmem>>, vector<2x128xf32>
    tpu.vector_store %arg4[%c0_12, %c0_13], %28 {strides = array<i32>} : memref<2x128xf32, #tpu.memory_space<vmem>>, vector<2x128xf32>,
    return
  }
  func.func @transform_0(%arg0: i32) -> (i32, i32) {
    %c0_i32 = arith.constant 0 : i32
    %c0_i32_0 = arith.constant 0 : i32
    return %arg0, %c0_i32 : i32, i32
  }
  func.func @transform_1(%arg0: i32) -> (i32, i32) {
    %c0_i32 = arith.constant 0 : i32
    %c0_i32_0 = arith.constant 0 : i32
    %c0_i32_1 = arith.constant 0 : i32
    return %c0_i32, %c0_i32_0 : i32, i32
  }
  func.func @transform_2(%arg0: i32) -> (i32, i32) {
    %c0_i32 = arith.constant 0 : i32
    %c0_i32_0 = arith.constant 0 : i32
    %c0_i32_1 = arith.constant 0 : i32
    return %c0_i32, %c0_i32_0 : i32, i32
  }
  func.func @transform_3(%arg0: i32) -> (i32, i32) {
    %c0_i32 = arith.constant 0 : i32
    %c0_i32_0 = arith.constant 0 : i32
    return %arg0, %c0_i32 : i32, i32
  }
}

</mosaic_0001>

<llo_original>
// kernel: tpu_custom_call.1
$region0: #{tpu_custom_call.1}
  #allocation0 [shape = 'u32[]', space=smem, size = 0x4, offset = 0x4, fixed_abs, tag = 'smem constant byte address 0x4 - core index']
  #allocation1 [shape = 'u32[144,128]{1,0:T(1,128)}', space=vmem, size = 0x12000, scoped, tag = 'internal scratch']
  %s0 = inlined_call_operand.hbm [shape: f32[2,64], index: 0, kind: input, shape index: {}]
  %s1 = inlined_call_operand.hbm [shape: f32[64,128], index: 1, kind: input, shape index: {}]
  %s2 = inlined_call_operand.vmem [shape: f32[1,128], index: 2, kind: input, shape index: {}]
  %s3 = inlined_call_operand.hbm [shape: f32[2,128], index: 3, kind: output, shape index: {}]
  %s4 = sld [smem:[#allocation0]]
  $region30: #{tpu_custom_call.1} parent=0
    _
  %s6 = ssub.s32 1, %s4
  %s7 = scalar_select 0, %s6, %s4
  $region1: #{tpu_custom_call.1} parent=0
    #allocation2 [shape = 'u8[1024]{0}', space=vmem, size = 0x400, scoped, tag = 'input window, operand 0, single buffered']
    #allocation3 [shape = 's32[1]{0}', space=sflag, size = 0x4, scoped, tag = 'scoped memory for tpu_custom_call.1']
    #allocation4 [shape = 's32[1]{0}', space=sflag, size = 0x4, scoped, tag = 'scoped memory for tpu_custom_call.1']
    #allocation5 [shape = 'u8[32768]{0}', space=vmem, size = 0x8000, scoped, tag = 'input window, operand 1, single buffered']
    #allocation6 [shape = 's32[1]{0}', space=sflag, size = 0x4, scoped, tag = 'scoped memory for tpu_custom_call.1']
    #allocation7 [shape = 'u8[1024]{0}', space=vmem, size = 0x400, scoped, tag = 'output window, operand 0, single buffered']
    %8 = vsyncpa [#allocation3], 0
    %9 = vsyncpa [#allocation6], 0
    %10 = vsyncpa [#allocation4], 0
    // Predicated region
    $region2: #{tpu_custom_call.1} parent=1 // pred_check
      _
    $region3: #{tpu_custom_call.1} parent=1 // pred_check_branch
      %12 = sbr.rel (0) target = $region5
    $region4: #{tpu_custom_call.1} parent=1 // pred_region
      %s14 = ssub.s32 32, 32
      %15 = vsyncadd [#allocation3], %s14
      %s17 = sshll.u32 [#allocation2], 4
      %s18 = int_to_ptr.vmem [resolvable:$true] %s17
      %20 = dma.hbm_to_vmem [thread:$0]  %s0, 32, %s18, [#allocation3]
    $region5: #{tpu_custom_call.1} parent=1 // pred_fallthru
      _
    // Predicated region
    $region6: #{tpu_custom_call.1} parent=1 // pred_check
      _
    $region7: #{tpu_custom_call.1} parent=1 // pred_check_branch
      %22 = sbr.rel (0) target = $region9
    $region8: #{tpu_custom_call.1} parent=1 // pred_region
      %s24 = ssub.s32 1024, 1024
      %25 = vsyncadd [#allocation6], %s24
      %s26 = sshll.u32 [#allocation5], 4
      %s27 = int_to_ptr.vmem [resolvable:$true] %s26
      %32 = dma.hbm_to_vmem [thread:$0]  %s1, 1024, %s27, [#allocation6], 128, 128, 8
    $region9: #{tpu_custom_call.1} parent=1 // pred_fallthru
      _
    // Predicated region
    $region10: #{tpu_custom_call.1} parent=1 // pred_check
      _
    $region11: #{tpu_custom_call.1} parent=1 // pred_check_branch
      %34 = sbr.rel (0) target = $region13
    $region12: #{tpu_custom_call.1} parent=1 // pred_region
      _
    $region13: #{tpu_custom_call.1} parent=1 // pred_fallthru
      _
    // Predicated region
    $region14: #{tpu_custom_call.1} parent=1 // pred_check
      _
    $region15: #{tpu_custom_call.1} parent=1 // pred_check_branch
      %36 = sbr.rel (0) target = $region17
    $region16: #{tpu_custom_call.1} parent=1 // pred_region
      %37 = dma.done [#allocation3], 32
    $region17: #{tpu_custom_call.1} parent=1 // pred_fallthru
      _
    // Predicated region
    $region18: #{tpu_custom_call.1} parent=1 // pred_check
      _
    $region19: #{tpu_custom_call.1} parent=1 // pred_check_branch
      %39 = sbr.rel (0) target = $region21
    $region20: #{tpu_custom_call.1} parent=1 // pred_region
      %40 = dma.done [#allocation6], 1024
    $region21: #{tpu_custom_call.1} parent=1 // pred_fallthru
      _
    %v41 = vld [vmem:[#allocation2] sm:$0x3]
    %v42 = vld [vmem:[#allocation5] sm:$0xff]
    %v43 = vld [vmem:[#allocation5 + $0x8] sm:$0xff]
    %v44 = vld [vmem:[#allocation5 + $0x10] sm:$0xff]
    %v45 = vld [vmem:[#allocation5 + $0x18] sm:$0xff]
    %v46 = vld [vmem:[#allocation5 + $0x20] sm:$0xff]
    %v47 = vld [vmem:[#allocation5 + $0x28] sm:$0xff]
    %v48 = vld [vmem:[#allocation5 + $0x30] sm:$0xff]
    %v49 = vld [vmem:[#allocation5 + $0x38] sm:$0xff]
    %v50 = vld [vmem:[%s2] sm:$0x1]
    %v52 = vlaneseq
    %v53 = vshrl.u32 %v52, 7
    %v54 = vsub.s32 0, %v53
    %v55 = vrot.slane %v50, %v54
    %vm57 = vcmask 523264
    %v59 = vsel %vm57, %v41, 0
    %61 = vmatprep.subr.mxu0 0.0
    %62 = vmatpush1.msra.mxu0 %v42
    %63 = vmatprep.subr.mxu0 0.0
    %64 = vmatpush1.msra.mxu0 %v43
    %65 = vmatprep.subr.mxu0 0.0
    %66 = vmatpush1.msra.mxu0 %v44
    %67 = vmatprep.subr.mxu0 0.0
    %68 = vmatpush1.msra.mxu0 %v45
    %69 = vmatprep.subr.mxu0 0.0
    %70 = vmatpush1.msra.mxu0 %v46
    %71 = vmatprep.subr.mxu0 0.0
    %72 = vmatpush1.msra.mxu0 %v47
    %73 = vmatprep.subr.mxu0 0.0
    %74 = vmatpush1.msra.mxu0 %v48
    %75 = vmatprep.subr.mxu0 0.0
    %76 = vmatpush1.msra.mxu0 %v49
    %77 = vmatprep.subr.mxu0 0.0
    %78 = vmatpush1.msra.mxu0 0.0
    %79 = vmatprep.subr.mxu0 0.0
    %80 = vmatpush1.msra.mxu0 0.0
    %81 = vmatprep.subr.mxu0 0.0
    %82 = vmatpush1.msra.mxu0 0.0
    %83 = vmatprep.subr.mxu0 0.0
    %84 = vmatpush1.msra.mxu0 0.0
    %85 = vmatprep.subr.mxu0 0.0
    %86 = vmatpush1.msra.mxu0 0.0
    %87 = vmatprep.subr.mxu0 0.0
    %88 = vmatpush1.msra.mxu0 0.0
    %89 = vmatprep.subr.mxu0 0.0
    %90 = vmatpush1.msra.mxu0 0.0
    %91 = vmatprep.subr.mxu0 0.0
    %92 = vmatpush1.msra.mxu0 0.0
    %93 = vmatprep.subr.mxu0 0.0
    %94 = vmatpush1.msra.mxu0 0.0
    %95 = vmatprep.subr.mxu0 0.0
    %96 = vmatpush1.msra.mxu0 0.0
    %97 = vmatprep.subr.mxu0 0.0
    %98 = vmatpush1.msra.mxu0 0.0
    %99 = vmatprep.subr.mxu0 0.0
    %100 = vmatpush1.msra.mxu0 0.0
    %101 = vmatprep.subr.mxu0 0.0
    %102 = vmatpush1.msra.mxu0 0.0
    %103 = vmatprep.subr.mxu0 0.0
    %104 = vmatpush1.msra.mxu0 0.0
    %105 = vmatprep.subr.mxu0 0.0
    %106 = vmatpush1.msra.mxu0 0.0
    %107 = vmatprep.subr.mxu0 0.0
    %108 = vmatpush1.msra.mxu0 0.0
    %109 = vmatprep.subr.mxu0 0.0
    %110 = vmatpush1.msra.mxu0 0.0
    %111 = vmatprep.subr.mxu0 0.0
    %112 = vmatpush1.msra.mxu0 0.0
    %113 = vmatprep.subr.mxu0 0.0
    %114 = vmatpush1.msra.mxu0 0.0
    %115 = vmatprep.subr.mxu0 0.0
    %116 = vmatpush1.msra.mxu0 0.0
    %117 = vmatprep.subr.mxu0 0.0
    %118 = vmatpush1.msra.mxu0 0.0
    %119 = vmatprep.subr.mxu0 0.0
    %120 = vmatpush1.msra.mxu0 0.0
    %121 = vmatprep.subr.mxu0 0.0
    %122 = vmatpush1.msra.mxu0 0.0
    %123 = vmatprep.subr.mxu0 0.0
    %124 = vmatpush1.msra.mxu0 0.0
    %125 = vmatprep.mubr.f32.mxu0 0.0
    %126 = vmatmul.mubr.f32.gmra.mrb[0].mxu0 %v59
    %v127 = vpop.f32.mrb[0].mxu0
    %v128 = vadd.f32 %v55, %v127
    %v129 = vpop.f32.mrb[0].mxu0
    %130 = vdwg.mxu0
    %v131 = vlaneseq
    %v132 = vand.u32 %v131, 127
    %vm133 = vcmp.lt.s32.totalorder %v132, 32
    %v134 = vsel %vm133, %v128, 0.0
    %vm135 = vcmask 1041408
    %v136 = vsel %vm135, %v134, 0.0
    %137 = vadd.xlane.f32.xlu0 %v136
    %v138 = vpop.xlane.xlu0 %137
    %v139 = vmul.f32 %v138, 0.03125
    %v140 = vsub.f32 %v128, %v139
    %v141 = vsel %vm133, %v140, 0.0
    %v142 = vmul.f32 %v141, %v141
    %v143 = vsel %vm135, %v142, 0.0
    %144 = vadd.xlane.f32.xlu0 %v143
    %v145 = vpop.xlane.xlu0 %144
    %v146 = vmul.f32 %v145, 0.03125
    %v147 = vadd.f32 %v146, 1e-05
    %v148 = vrsqrt.pop %v147
    %v149 = vmul.f32 %v141, %v148
    %150 = vst [vmem:[#allocation7] sm:$0x3] %v149
    // Predicated region
    $region22: #{tpu_custom_call.1} parent=1 // pred_check
      _
    $region23: #{tpu_custom_call.1} parent=1 // pred_check_branch
      %152 = sbr.rel (0) target = $region25
    $region24: #{tpu_custom_call.1} parent=1 // pred_region
      %s154 = ssub.s32 32, 32
      %155 = vsyncadd [#allocation4], %s154
      %s157 = sshll.u32 [#allocation7], 4
      %s158 = int_to_ptr.vmem [resolvable:$true] %s157
      %160 = dma.vmem_to_hbm [thread:$0]  %s158, 32, %s3, [#allocation4]
    $region25: #{tpu_custom_call.1} parent=1 // pred_fallthru
      _
    // Predicated region
    $region26: #{tpu_custom_call.1} parent=1 // pred_check
      _
    $region27: #{tpu_custom_call.1} parent=1 // pred_check_branch
      %162 = sbr.rel (0) target = $region29
    $region28: #{tpu_custom_call.1} parent=1 // pred_region
      %163 = dma.done [#allocation4], 32
    $region29: #{tpu_custom_call.1} parent=1 // pred_fallthru
      _
    %164 = vsyncpa [#allocation3], 1
    %165 = vsyncpa [#allocation6], 1
    %166 = vsyncpa [#allocation4], 1

</llo_original>
